<compile_context>
chip_gen: v7x
topology: tpu7x:2x2x1
jax: 0.10.0
libtpu: 0.0.40
codegen_flags: <defaults>
</compile_context>

<pallas_src>
import functools
import math

import jax
import jax.numpy as jnp
from jax.experimental import pallas as pl
from jax.experimental.pallas import tpu as pltpu

LN_EPS = 1e-5
NEG_INF = -1e30
ATTN_TILE = 256  # default flash-attention q/kv tile

_VMEM_LIMIT = None


def _vmem_limit_bytes():
    """~3/4 of physical VMEM: ~48 MiB on v7x (64 MiB), ~96 MiB on v5e/v6e (128 MiB)."""
    global _VMEM_LIMIT
    if _VMEM_LIMIT is None:
        limit = 48 * 1024 * 1024  # safe on every generation
        try:
            cap = int(getattr(pltpu.get_tpu_info(), "vmem_capacity_bytes", 0))
            if cap > 0:
                limit = (cap * 3) // 4
        except Exception:
            pass
        _VMEM_LIMIT = limit
    return _VMEM_LIMIT


def _cp(dim_sem=None):
    return pltpu.CompilerParams(dimension_semantics=dim_sem,
                                vmem_limit_bytes=_vmem_limit_bytes())


def _pick_tile(n, preferred):
    """Largest MXU/lane-friendly tile that divides n (falls back to full extent)."""
    for t in (preferred, 512, 256, 128):
        if t <= n and n % t == 0:
            return t
    return n


def _layernorm(y_f32, g, b):
    mu = jnp.mean(y_f32, axis=-1, keepdims=True)
    var = jnp.mean(jnp.square(y_f32 - mu), axis=-1, keepdims=True)
    return (y_f32 - mu) * jax.lax.rsqrt(var + LN_EPS) * g + b


# ----------------------- full-K resident-weight linear ------------------------
def linear_kernel(x_ref, w_ref, b_ref, o_ref, *, activation):
    y = jnp.dot(x_ref[...], w_ref[...], preferred_element_type=jnp.float32)
    y = y + b_ref[...].astype(jnp.float32)
    if activation == "gelu":
        # TODO(synk): HF RobertaIntermediate default is exact erf-GELU; tanh
        # approximation used for guaranteed TPU (EUP) lowering.
        y = jax.nn.gelu(y, approximate=True)
    o_ref[...] = y.astype(o_ref.dtype)


def linear(x, w, b, activation=None, *, tm=256, tn=256, out_dtype=jnp.bfloat16):
    """Y = act(X @ W + b). Grid (n, m) with m innermost: the (K, tn) weight slab
    stays resident in VMEM across all token tiles (one HBM pass per slab)."""
    M, K = x.shape
    K2, N = w.shape
    assert K == K2
    tm = _pick_tile(M, tm)
    tn = _pick_tile(N, tn)
    cost = pl.CostEstimate(
        flops=2 * M * N * K,
        transcendentals=M * N if activation == "gelu" else 0,
        bytes_accessed=(M * K + K * N) * 2 + M * N * 2,
    )
    return pl.pallas_call(
        functools.partial(linear_kernel, activation=activation),
        out_shape=jax.ShapeDtypeStruct((M, N), out_dtype),
        grid_spec=pltpu.PrefetchScalarGridSpec(
            num_scalar_prefetch=0,
            grid=(N // tn, M // tm),
            in_specs=[
                pl.BlockSpec((tm, K), lambda n, m: (m, 0)),
                pl.BlockSpec((K, tn), lambda n, m: (0, n)),   # resident across m
                pl.BlockSpec((1, tn), lambda n, m: (0, n)),
            ],
            out_specs=pl.BlockSpec((tm, tn), lambda n, m: (m, n)),
        ),
        compiler_params=_cp(("parallel", "parallel")),
        cost_estimate=cost,
    )(x, w, b)


# ------------- flash attention: head on grid + segment-tile skipping ----------
def flash_attn_kernel(qlo_ref, qhi_ref, klo_ref, khi_ref,
                      q_ref, k_ref, v_ref, sq_ref, sk_ref,
                      o_ref, m_ref, l_ref, acc_ref, *, scale):
    qi = pl.program_id(1)
    ki = pl.program_id(2)

    @pl.when(ki == 0)
    def _():
        m_ref[...] = jnp.full(m_ref.shape, NEG_INF, jnp.float32)
        l_ref[...] = jnp.zeros_like(l_ref)
        acc_ref[...] = jnp.zeros_like(acc_ref)

    # Skip (q_tile, kv_tile) pairs whose segment ranges do not overlap: with
    # contiguous sequences this turns O(T^2) attention into per-sequence O(L^2).
    # TODO(synk): the kv DMA for skipped tiles still happens (BlockSpec-driven);
    # a data-dependent kv index remap would eliminate it entirely.
    overlap = jnp.logical_and(qlo_ref[qi] <= khi_ref[ki],
                              klo_ref[ki] <= qhi_ref[qi])

    @pl.when(overlap)
    def _():
        q = q_ref[0]                                     # [tq, hd] bf16
        k = k_ref[0]                                     # [tk, hd] bf16
        v = v_ref[0]                                     # [tk, hd] bf16
        s = jax.lax.dot_general(q, k, (((1,), (1,)), ((), ())),
                                preferred_element_type=jnp.float32) * scale
        same = sq_ref[...] == sk_ref[...]                # [tq,1]==[1,tk] -> [tq,tk]
        s = jnp.where(same, s, NEG_INF)
        m_prev = m_ref[...]
        m_new = jnp.maximum(m_prev, s.max(axis=-1, keepdims=True))
        alpha = jnp.exp(m_prev - m_new)
        # explicit mask on p: fully-masked rows contribute exactly 0 to l/acc
        p = jnp.where(same, jnp.exp(s - m_new), 0.0)
        l_ref[...] = alpha * l_ref[...] + p.sum(axis=-1, keepdims=True)
        acc_ref[...] = alpha * acc_ref[...] + jnp.dot(
            p.astype(v.dtype), v, preferred_element_type=jnp.float32)
        m_ref[...] = m_new

    @pl.when(ki == pl.num_programs(2) - 1)
    def _():
        o_ref[0] = (acc_ref[...] *
                    pl.reciprocal(l_ref[...], approx=True)).astype(o_ref.dtype)


def flash_attention(qkv_h, seg_col, seg_row, qlo, qhi, klo, khi,
                    *, num_heads, tq, tk):
    """qkv_h: [3*NH, T, hd] (q heads 0..NH-1, k heads NH..2NH-1, v heads 2NH..)."""
    C, T, hd = qkv_h.shape
    NH = num_heads
    assert C == 3 * NH and T % tq == 0 and T % tk == 0
    kern = functools.partial(flash_attn_kernel, scale=1.0 / math.sqrt(hd))
    return pl.pallas_call(
        kern,
        out_shape=jax.ShapeDtypeStruct((NH, T, hd), jnp.bfloat16),
        grid_spec=pltpu.PrefetchScalarGridSpec(
            num_scalar_prefetch=4,
            grid=(NH, T // tq, T // tk),
            in_specs=[
                pl.BlockSpec((1, tq, hd), lambda h, qi, ki, *_: (h, qi, 0)),
                pl.BlockSpec((1, tk, hd), lambda h, qi, ki, *_: (NH + h, ki, 0)),
                pl.BlockSpec((1, tk, hd), lambda h, qi, ki, *_: (2 * NH + h, ki, 0)),
                pl.BlockSpec((tq, 1), lambda h, qi, ki, *_: (qi, 0)),
                pl.BlockSpec((1, tk), lambda h, qi, ki, *_: (0, ki)),
            ],
            out_specs=pl.BlockSpec((1, tq, hd), lambda h, qi, ki, *_: (h, qi, 0)),
            scratch_shapes=[
                pltpu.VMEM((tq, 1), jnp.float32),    # running max
                pltpu.VMEM((tq, 1), jnp.float32),    # running sum
                pltpu.VMEM((tq, hd), jnp.float32),   # output accumulator
            ],
        ),
        compiler_params=_cp(("parallel", "parallel", "arbitrary")),
    )(qlo, qhi, klo, khi, qkv_h, qkv_h, qkv_h, seg_col, seg_row)


# --------- attention output projection + residual + LayerNorm (fused) ---------
def attn_out_ln_kernel(ctx_ref, w_ref, b_ref, r_ref, g_ref, bt_ref, o_ref,
                       *, num_heads):
    # Merge heads inside the contraction: sum_h ctx[h] @ wo[h]  -> [tm, H]
    # TODO(synk): the hd=64-deep contraction underfeeds the 256-deep MXU on
    # v6e/v7x; avoiding it would reintroduce an XLA head-merge relayout.
    acc = jnp.dot(ctx_ref[0], w_ref[0], preferred_element_type=jnp.float32)
    for h in range(1, num_heads):
        acc = acc + jnp.dot(ctx_ref[h], w_ref[h],
                            preferred_element_type=jnp.float32)
    y = acc + b_ref[...].astype(jnp.float32) + r_ref[...].astype(jnp.float32)
    o_ref[...] = _layernorm(y, g_ref[...], bt_ref[...]).astype(o_ref.dtype)


def attn_out_add_ln(ctx, w_r, b, resid, gamma, beta, *, tm=256):
    NH, T, hd = ctx.shape
    NH2, hd2, H = w_r.shape
    assert NH == NH2 and hd == hd2
    tm = _pick_tile(T, tm)
    return pl.pallas_call(
        functools.partial(attn_out_ln_kernel, num_heads=NH),
        out_shape=jax.ShapeDtypeStruct((T, H), jnp.bfloat16),
        grid_spec=pltpu.PrefetchScalarGridSpec(
            num_scalar_prefetch=0,
            grid=(T // tm,),
            in_specs=[
                pl.BlockSpec((NH, tm, hd), lambda m: (0, m, 0)),
                pl.BlockSpec((NH, hd, H), lambda m: (0, 0, 0)),  # resident weight
                pl.BlockSpec((1, H), lambda m: (0, 0)),
                pl.BlockSpec((tm, H), lambda m: (m, 0)),         # residual
                pl.BlockSpec((1, H), lambda m: (0, 0)),
                pl.BlockSpec((1, H), lambda m: (0, 0)),
            ],
            out_specs=pl.BlockSpec((tm, H), lambda m: (m, 0)),
        ),
        compiler_params=_cp(("parallel",)),
        cost_estimate=pl.CostEstimate(
            flops=2 * T * H * H, transcendentals=0,
            bytes_accessed=(NH * T * hd + NH * hd * H + 2 * T * H) * 2),
    )(ctx, w_r, b, resid, gamma, beta)


# ---------------- FFN output projection + residual + LayerNorm ----------------
def ffn_out_ln_kernel(x_ref, w_ref, b_ref, r_ref, g_ref, bt_ref, o_ref):
    y = jnp.dot(x_ref[...], w_ref[...], preferred_element_type=jnp.float32)
    y = y + b_ref[...].astype(jnp.float32) + r_ref[...].astype(jnp.float32)
    o_ref[...] = _layernorm(y, g_ref[...], bt_ref[...]).astype(o_ref.dtype)


def ffn_out_add_ln(x, w, b, resid, gamma, beta, *, tm=256):
    M, K = x.shape
    K2, H = w.shape
    assert K == K2
    tm = _pick_tile(M, tm)
    return pl.pallas_call(
        ffn_out_ln_kernel,
        out_shape=jax.ShapeDtypeStruct((M, H), jnp.bfloat16),
        grid_spec=pltpu.PrefetchScalarGridSpec(
            num_scalar_prefetch=0,
            grid=(M // tm,),
            in_specs=[
                pl.BlockSpec((tm, K), lambda m: (m, 0)),
                pl.BlockSpec((K, H), lambda m: (0, 0)),   # full weight resident
                pl.BlockSpec((1, H), lambda m: (0, 0)),
                pl.BlockSpec((tm, H), lambda m: (m, 0)),  # residual
                pl.BlockSpec((1, H), lambda m: (0, 0)),
                pl.BlockSpec((1, H), lambda m: (0, 0)),
            ],
            out_specs=pl.BlockSpec((tm, H), lambda m: (m, 0)),
        ),
        compiler_params=_cp(("parallel",)),
        cost_estimate=pl.CostEstimate(
            flops=2 * M * K * H, transcendentals=0,
            bytes_accessed=(M * K + K * H + 2 * M * H) * 2),
    )(x, w, b, resid, gamma, beta)


# ------------------------- embeddings sum + LayerNorm -------------------------
def embed_ln_kernel(we_ref, pe_ref, te_ref, g_ref, b_ref, o_ref):
    h = (we_ref[...].astype(jnp.float32) + te_ref[...].astype(jnp.float32)
         + pe_ref[...].astype(jnp.float32))
    o_ref[...] = _layernorm(h, g_ref[...], b_ref[...]).astype(o_ref.dtype)


def roberta_embed(we, pe, te, g, b, *, tm=256):
    T, H = we.shape
    tm = _pick_tile(T, tm)
    return pl.pallas_call(
        embed_ln_kernel,
        out_shape=jax.ShapeDtypeStruct((T, H), jnp.bfloat16),
        grid_spec=pltpu.PrefetchScalarGridSpec(
            num_scalar_prefetch=0,
            grid=(T // tm,),
            in_specs=[
                pl.BlockSpec((tm, H), lambda i: (i, 0)),
                pl.BlockSpec((tm, H), lambda i: (i, 0)),
                pl.BlockSpec((tm, H), lambda i: (i, 0)),
                pl.BlockSpec((1, H), lambda i: (0, 0)),
                pl.BlockSpec((1, H), lambda i: (0, 0)),
            ],
            out_specs=pl.BlockSpec((tm, H), lambda i: (i, 0)),
        ),
        compiler_params=_cp(("parallel",)),
    )(we, pe, te, g, b)


# ---------------------- classification head (lane-padded) ---------------------
def classifier_kernel(x_ref, wd_ref, bd_ref, wp_ref, bp_ref, o_ref):
    x = x_ref[...].astype(jnp.float32)
    h = jnp.dot(x, wd_ref[...], preferred_element_type=jnp.float32) + bd_ref[...]
    h = jnp.tanh(h)
    o_ref[...] = jnp.dot(h, wp_ref[...],
                         preferred_element_type=jnp.float32) + bp_ref[...]


def classification_head(cls_hidden, cparams):
    S, H = cls_hidden.shape
    Lp = cparams["wp"].shape[1]  # padded to 128 for lane-dense stores
    vm = pl.BlockSpec(memory_space=pltpu.MemorySpace.VMEM)
    logits_padded = pl.pallas_call(
        classifier_kernel,
        out_shape=jax.ShapeDtypeStruct((S, Lp), jnp.float32),
        in_specs=[vm] * 5,
        out_specs=vm,
        compiler_params=_cp(),
    )(cls_hidden, cparams["wd"], cparams["bd"], cparams["wp"], cparams["bp"])
    # TODO(synk): ClassifierPooler act_fn (softmax/sigmoid) on logits not included.
    return logits_padded[:, :cparams["num_labels"]]


# ------------------------------ glue (plain JAX) -------------------------------
def create_position_ids_from_input_ids(input_ids, padding_idx):
    mask = (input_ids != padding_idx).astype(jnp.int32)
    incremental = jnp.cumsum(mask, axis=0) * mask
    return incremental + padding_idx


def replace_roberta_positions(input_ids, seq_lens, padding_idx):
    parts, off = [], 0
    for L in seq_lens:
        parts.append(
            create_position_ids_from_input_ids(input_ids[off:off + L], padding_idx))
        off += L
    return jnp.concatenate(parts, axis=0)


def make_segments(seq_lens):
    return jnp.concatenate(
        [jnp.full((L,), i, dtype=jnp.int32) for i, L in enumerate(seq_lens)])


def _tile_seg_ranges(seg, tile):
    n = seg.shape[0] // tile
    s = seg[: n * tile].reshape(n, tile)
    return s.min(axis=1).astype(jnp.int32), s.max(axis=1).astype(jnp.int32)


def encoder_layer(x, p, seg_col, seg_row, ranges, tiles, num_heads):
    T, H = x.shape
    hd = H // num_heads

    # Full-width QKV projection keeps the MXU fed (tn multiple of 128/256).
    qkv = linear(x, p["wqkv"], p["bqkv"])                     # [T, 3H] bf16
    # Single relayout to head-major [3NH, T, hd].
    # TODO(synk): fold this relayout into the QKV out_spec (needs tn | H and
    # per-head stores in-kernel) to remove the remaining XLA transpose.
    qkv_h = (qkv.reshape(T, 3, num_heads, hd)
                .transpose(1, 2, 0, 3)
                .reshape(3 * num_heads, T, hd))

    qlo, qhi, klo, khi = ranges
    tq, tk = tiles
    ctx = flash_attention(qkv_h, seg_col, seg_row, qlo, qhi, klo, khi,
                          num_heads=num_heads, tq=tq, tk=tk)  # [NH, T, hd]

    # out-proj + residual + LN fused (consumes [NH,T,hd] directly, no transpose)
    h1 = attn_out_add_ln(ctx, p["wo_r"], p["bo"], x, p["ln1_g"], p["ln1_b"])

    inter = linear(h1, p["wi"], p["bi"], activation="gelu")   # [T, I]
    # FFN out-proj + residual + LN fused, full [I, H] weight resident
    return ffn_out_add_ln(inter, p["wo2"], p["bo2"], h1, p["ln2_g"], p["ln2_b"])


def roberta_forward(input_ids, seq_lens, params, cfg):
    T = input_ids.shape[0]

    # 1) RoBERTa position ids (replace_roberta_positions semantics)
    positions = replace_roberta_positions(input_ids, seq_lens, cfg["pad_token_id"])
    token_type_ids = jnp.zeros_like(input_ids)

    # 2) embedding lookups (gather left as XLA glue), sum + LayerNorm in kernel
    # TODO(synk): fuse the row gathers into the kernel via scalar-prefetched ids
    # to avoid the extra HBM round trip on long prefills.
    we = params["word_emb"][input_ids]
    pe = params["pos_emb"][positions]
    te = params["type_emb"][token_type_ids]
    hidden = roberta_embed(we, pe, te, params["emb_ln_g"], params["emb_ln_b"])

    # 3) per-token segment ids + per-tile segment ranges (scalar prefetch)
    seg = make_segments(seq_lens)
    seg_col, seg_row = seg[:, None], seg[None, :]
    tq = _pick_tile(T, ATTN_TILE)
    tk = _pick_tile(T, ATTN_TILE)
    qlo, qhi = _tile_seg_ranges(seg, tq)
    klo, khi = _tile_seg_ranges(seg, tk)

    for layer_params in params["layers"]:
        hidden = encoder_layer(hidden, layer_params, seg_col, seg_row,
                               (qlo, qhi, klo, khi), (tq, tk), cfg["num_heads"])
    return hidden  # forward() output: [T, H]


# ----------------------------------- main --------------------------------------
def init_params(key, cfg):
    H, I, NH = cfg["hidden"], cfg["intermediate"], cfg["num_heads"]
    hd = H // NH
    keys = iter(jax.random.split(key, 128))

    def w(shape, dtype=jnp.bfloat16):
        return (jax.random.normal(next(keys), shape, jnp.float32) * 0.02).astype(dtype)

    nl = cfg["num_labels"]
    wp = jnp.zeros((H, 128), jnp.float32).at[:, :nl].set(
        jax.random.normal(next(keys), (H, nl), jnp.float32) * 0.02)

    params = {
        "word_emb": w((cfg["vocab"], H)),
        "pos_emb": w((cfg["max_pos"], H)),
        "type_emb": w((cfg["type_vocab"], H)),
        "emb_ln_g": jnp.ones((1, H), jnp.float32),
        "emb_ln_b": jnp.zeros((1, H), jnp.float32),
        "layers": [],
        "classifier": {
            "wd": w((H, H), jnp.float32),
            "bd": jnp.zeros((1, H), jnp.float32),
            "wp": wp,                                 # lane-padded [H, 128]
            "bp": jnp.zeros((1, 128), jnp.float32),
            "num_labels": nl,
        },
    }
    for _ in range(cfg["num_layers"]):
        wo = w((H, H))                                 # [H, H] dense out-proj
        params["layers"].append({
            "wqkv": w((H, 3 * H)), "bqkv": jnp.zeros((1, 3 * H), jnp.float32),
            "wo_r": wo.reshape(NH, hd, H),             # head-major out-proj weight
            "bo": jnp.zeros((1, H), jnp.float32),
            "ln1_g": jnp.ones((1, H), jnp.float32),
            "ln1_b": jnp.zeros((1, H), jnp.float32),
            "wi": w((H, I)), "bi": jnp.zeros((1, I), jnp.float32),
            "wo2": w((I, H)), "bo2": jnp.zeros((1, H), jnp.float32),
            "ln2_g": jnp.ones((1, H), jnp.float32),
            "ln2_b": jnp.zeros((1, H), jnp.float32),
        })
    return params


if __name__ == "__main__":
    cfg = dict(vocab=128, hidden=128, num_heads=2, intermediate=256,
               num_layers=2, max_pos=512, type_vocab=2, pad_token_id=1,
               num_labels=2)
    # three flattened sequences -> exercises tile skipping + partial masks
    seq_lens = [256, 128, 128]
    T = sum(seq_lens)                                  # 512 tokens

    key = jax.random.PRNGKey(0)
    k_ids, k_params = jax.random.split(key)
    params = init_params(k_params, cfg)

    # tokens avoid pad id 1
    input_ids = jax.random.randint(k_ids, (T,), 3, cfg["vocab"], dtype=jnp.int32)

    # forward(): encoder hidden states [T, H]
    hidden = roberta_forward(input_ids, seq_lens, params, cfg)
    hidden = jax.block_until_ready(hidden)

    # classify/score pooling path: CLS pool + RobertaClassificationHead
    offsets = [0]
    for L in seq_lens[:-1]:
        offsets.append(offsets[-1] + L)
    cls_idx = jnp.array(offsets, jnp.int32)
    cls_hidden = hidden[cls_idx]
    logits = classification_head(cls_hidden, params["classifier"])
    logits = jax.block_until_ready(logits)

    assert hidden.shape == (T, cfg["hidden"])
    assert logits.shape == (len(seq_lens), cfg["num_labels"])
    assert bool(jnp.all(jnp.isfinite(hidden.astype(jnp.float32))))
    assert bool(jnp.all(jnp.isfinite(logits)))
    print("KERNEL_OK")
</pallas_src>

<mosaic_0001>
module attributes {stable_mosaic.version = 11 : i64} {
  func.func @embed_ln_kernel(%arg0: i32, %arg1: memref<256x128xbf16, #tpu.memory_space<vmem>>, %arg2: memref<256x128xbf16, #tpu.memory_space<vmem>>, %arg3: memref<256x128xbf16, #tpu.memory_space<vmem>>, %arg4: memref<1x128xf32, #tpu.memory_space<vmem>>, %arg5: memref<1x128xf32, #tpu.memory_space<vmem>>, %arg6: memref<256x128xbf16, #tpu.memory_space<vmem>>) attributes {dimension_semantics = [#tpu.dimension_semantics<parallel>], iteration_bounds = array<i64: 2>, scalar_prefetch = 0 : i64, scratch_operands = 0 : i64, tpu.core_type = #tpu.core_type<tc>, window_params = [{transform_indices = @transform_0, window_bounds = array<i64: 256, 128>}, {transform_indices = @transform_1, window_bounds = array<i64: 256, 128>}, {transform_indices = @transform_2, window_bounds = array<i64: 256, 128>}, {pipeline_mode = #tpu.pipeline_mode<synchronous>, transform_indices = @transform_3, window_bounds = array<i64: 1, 128>}, {pipeline_mode = #tpu.pipeline_mode<synchronous>, transform_indices = @transform_4, window_bounds = array<i64: 1, 128>}, {transform_indices = @transform_5, window_bounds = array<i64: 256, 128>}]} {
    %c0 = arith.constant 0 : index
    %c0_0 = arith.constant 0 : index
    %0 = vector.load %arg1[%c0, %c0_0] : memref<256x128xbf16, #tpu.memory_space<vmem>>, vector<256x128xbf16>
    %1 = arith.extf %0 : vector<256x128xbf16> to vector<256x128xf32>
    %c0_1 = arith.constant 0 : index
    %c0_2 = arith.constant 0 : index
    %2 = vector.load %arg3[%c0_1, %c0_2] : memref<256x128xbf16, #tpu.memory_space<vmem>>, vector<256x128xbf16>
    %3 = arith.extf %2 : vector<256x128xbf16> to vector<256x128xf32>
    %4 = arith.addf %1, %3 : vector<256x128xf32>
    %c0_3 = arith.constant 0 : index
    %c0_4 = arith.constant 0 : index
    %5 = vector.load %arg2[%c0_3, %c0_4] : memref<256x128xbf16, #tpu.memory_space<vmem>>, vector<256x128xbf16>
    %6 = arith.extf %5 : vector<256x128xbf16> to vector<256x128xf32>
    %7 = arith.addf %4, %6 : vector<256x128xf32>
    %c0_5 = arith.constant 0 : index
    %c0_6 = arith.constant 0 : index
    %8 = vector.load %arg4[%c0_5, %c0_6] : memref<1x128xf32, #tpu.memory_space<vmem>>, vector<1x128xf32>
    %c0_7 = arith.constant 0 : index
    %c0_8 = arith.constant 0 : index
    %9 = vector.load %arg5[%c0_7, %c0_8] : memref<1x128xf32, #tpu.memory_space<vmem>>, vector<1x128xf32>
    %cst = arith.constant dense<0.000000e+00> : vector<256xf32>
    %10 = vector.multi_reduction <add>, %7, %cst [1] : vector<256x128xf32> to vector<256xf32>
    %11 = vector.shape_cast %10 : vector<256xf32> to vector<256x1xf32>
    %cst_9 = arith.constant 1.280000e+02 : f32
    %12 = vector.broadcast %cst_9 : f32 to vector<256x1xf32>
    %13 = arith.divf %11, %12 : vector<256x1xf32>
    %14 = vector.broadcast %13 : vector<256x1xf32> to vector<256x128xf32>
    %15 = arith.subf %7, %14 : vector<256x128xf32>
    %16 = arith.mulf %15, %15 : vector<256x128xf32>
    %cst_10 = arith.constant dense<0.000000e+00> : vector<256xf32>
    %17 = vector.multi_reduction <add>, %16, %cst_10 [1] : vector<256x128xf32> to vector<256xf32>
    %18 = vector.shape_cast %17 : vector<256xf32> to vector<256x1xf32>
    %cst_11 = arith.constant 1.280000e+02 : f32
    %19 = vector.broadcast %cst_11 : f32 to vector<256x1xf32>
    %20 = arith.divf %18, %19 : vector<256x1xf32>
    %21 = vector.broadcast %13 : vector<256x1xf32> to vector<256x128xf32>
    %22 = arith.subf %7, %21 : vector<256x128xf32>
    %cst_12 = arith.constant 9.99999974E-6 : f32
    %23 = vector.broadcast %cst_12 : f32 to vector<256x1xf32>
    %24 = arith.addf %20, %23 : vector<256x1xf32>
    %25 = math.rsqrt %24 : vector<256x1xf32>
    %26 = vector.broadcast %25 : vector<256x1xf32> to vector<256x128xf32>
    %27 = arith.mulf %22, %26 : vector<256x128xf32>
    %28 = vector.broadcast %8 : vector<1x128xf32> to vector<256x128xf32>
    %29 = arith.mulf %27, %28 : vector<256x128xf32>
    %30 = vector.broadcast %9 : vector<1x128xf32> to vector<256x128xf32>
    %31 = arith.addf %29, %30 : vector<256x128xf32>
    %32 = arith.truncf %31 : vector<256x128xf32> to vector<256x128xbf16>
    %c0_13 = arith.constant 0 : index
    %c0_14 = arith.constant 0 : index
    %33 = vector.load %arg6[%c0_13, %c0_14] : memref<256x128xbf16, #tpu.memory_space<vmem>>, vector<256x128xbf16>
    tpu.vector_store %arg6[%c0_13, %c0_14], %32 {strides = array<i32>} : memref<256x128xbf16, #tpu.memory_space<vmem>>, vector<256x128xbf16>,
    return
  }
  func.func @transform_0(%arg0: i32) -> (i32, i32) {
    %c0_i32 = arith.constant 0 : i32
    %c0_i32_0 = arith.constant 0 : i32
    return %arg0, %c0_i32 : i32, i32
  }
  func.func @transform_1(%arg0: i32) -> (i32, i32) {
    %c0_i32 = arith.constant 0 : i32
    %c0_i32_0 = arith.constant 0 : i32
    return %arg0, %c0_i32 : i32, i32
  }
  func.func @transform_2(%arg0: i32) -> (i32, i32) {
    %c0_i32 = arith.constant 0 : i32
    %c0_i32_0 = arith.constant 0 : i32
    return %arg0, %c0_i32 : i32, i32
  }
  func.func @transform_3(%arg0: i32) -> (i32, i32) {
    %c0_i32 = arith.constant 0 : i32
    %c0_i32_0 = arith.constant 0 : i32
    %c0_i32_1 = arith.constant 0 : i32
    return %c0_i32, %c0_i32_0 : i32, i32
  }
  func.func @transform_4(%arg0: i32) -> (i32, i32) {
    %c0_i32 = arith.constant 0 : i32
    %c0_i32_0 = arith.constant 0 : i32
    %c0_i32_1 = arith.constant 0 : i32
    return %c0_i32, %c0_i32_0 : i32, i32
  }
  func.func @transform_5(%arg0: i32) -> (i32, i32) {
    %c0_i32 = arith.constant 0 : i32
    %c0_i32_0 = arith.constant 0 : i32
    return %arg0, %c0_i32 : i32, i32
  }
}

</mosaic_0001>

<llo_original>
// kernel: tpu_custom_call.1
$region0: #{tpu_custom_call.1}
  #allocation0 [shape = 'u32[]', space=smem, size = 0x4, offset = 0x4, fixed_abs, tag = 'smem constant byte address 0x4 - core index']
  #allocation1 [shape = 'u32[144,128]{1,0:T(1,128)}', space=vmem, size = 0x12000, scoped, tag = 'internal scratch']
  %s0 = inlined_call_operand.hbm [shape: bf16[512,128], index: 0, kind: input, shape index: {}]
  %s1 = inlined_call_operand.hbm [shape: bf16[512,128], index: 1, kind: input, shape index: {}]
  %s2 = inlined_call_operand.hbm [shape: bf16[512,128], index: 2, kind: input, shape index: {}]
  %s3 = inlined_call_operand.vmem [shape: f32[1,128], index: 3, kind: input, shape index: {}]
  %s4 = inlined_call_operand.vmem [shape: f32[1,128], index: 4, kind: input, shape index: {}]
  %s5 = inlined_call_operand.hbm [shape: bf16[512,128], index: 5, kind: output, shape index: {}]
  %s6 = sld [smem:[#allocation0]]
  $region65: #{tpu_custom_call.1} parent=0
    _
  %s8 = ssub.s32 1, %s6
  %s9 = scalar_select 0, %s8, %s6
  $region1: #{tpu_custom_call.1} parent=0
    #allocation2 [shape = 'u8[131072]{0}', space=vmem, size = 0x20000, scoped, tag = 'input window, operand 0']
    #allocation3 [shape = 's32[2]{0}', space=sflag, size = 0x8, scoped, tag = 'scoped memory for tpu_custom_call.1']
    #allocation4 [shape = 's32[2]{0}', space=sflag, size = 0x8, scoped, tag = 'scoped memory for tpu_custom_call.1']
    #allocation5 [shape = 'u8[131072]{0}', space=vmem, size = 0x20000, scoped, tag = 'input window, operand 1']
    #allocation6 [shape = 's32[2]{0}', space=sflag, size = 0x8, scoped, tag = 'scoped memory for tpu_custom_call.1']
    #allocation7 [shape = 'u8[131072]{0}', space=vmem, size = 0x20000, scoped, tag = 'input window, operand 2']
    #allocation8 [shape = 'u8[131072]{0}', space=vmem, size = 0x20000, scoped, tag = 'output window, operand 0']
    %10 = vsyncpa [#allocation3], 0
    %s11 = scalar_lea.sflag [#allocation3], 1
    %12 = vsyncpa %s11, 0
    %13 = vsyncpa [#allocation6], 0
    %s14 = scalar_lea.sflag [#allocation6], 1
    %15 = vsyncpa %s14, 0
    %16 = vsyncpa [#allocation4], 0
    %s17 = scalar_lea.sflag [#allocation4], 1
    %18 = vsyncpa %s17, 0
    loop: start=0, step=1, limit=4
    $region2: #{tpu_custom_call.1} parent=1 // loop_pre_header
      _
    $region3: #{tpu_custom_call.1} parent=1 // loop_header
      %s20 = sphi 0, %s24
      %p21 = scmp.ge.s32.totalorder %s20, 4
      %s30 = sphi 0, %s32
      %s33 = sphi 0, %s30
      %s34 = sphi 0, %s33
      %s50 = sphi 0, %s34
      %s56 = sphi 0, %s58
      %s59 = sphi 0, %s56
      %s60 = sphi 0, %s59
      %s76 = sphi 0, %s60
      %s82 = sphi 0, %s84
      %s85 = sphi 0, %s82
      %s86 = sphi 0, %s85
      %s102 = sphi 0, %s86
      %s106 = sphi 0, %s106
      %s108 = sphi 0, %s106
      %s109 = sphi 0, %s108
      %s123 = sphi 0, %s109
      %s127 = sphi 0, %s127
      %s129 = sphi 0, %s127
      %s130 = sphi 0, %s129
      %s144 = sphi 0, %s130
      %s150 = sphi 0, %s152
      %s153 = sphi 0, %s150
      %s154 = sphi 0, %s153
      %s170 = sphi 0, %s154
    $region4: #{tpu_custom_call.1} parent=1 // loop_header_branch
      %23 = sbr.rel (%p21) target = $region8
    $region5: #{tpu_custom_call.1} parent=1 // loop_body
      %s25 = ssub.s32 %s20, 1
      %s26 = ssub.s32 %s20, 2
      %s27 = sadd.s32 %s20, 1
      %s28 = ssub.s32 %s20, %s27
      %p29 = scmp.eq.s32.totalorder %s28, 0
      %s31 = sadd.s32 %s30, 1
      %s32 = scalar_select %p29, %s30, %s31
      %p35 = pneg %p29
      %p36 = scmp.eq.s32.totalorder %s20, 1
      %p37 = por %p35, %p36
      %p38 = scmp.ne.s32.totalorder %s30, %s33
      %p39 = scmp.eq.s32.totalorder %s20, 0
      %p40 = por %p38, %p39
      %p41 = scmp.ne.s32.totalorder %s30, %s33
      %p42 = scmp.eq.s32.totalorder %s25, 1
      %p43 = por %p41, %p42
      %p44 = scmp.ne.s32.totalorder %s33, %s34
      %p45 = scmp.eq.s32.totalorder %s25, 0
      %p46 = por %p44, %p45
      %p47 = scmp.ne.s32.totalorder %s33, %s34
      %p48 = scmp.eq.s32.totalorder %s26, 1
      %p49 = por %p47, %p48
      %p51 = scmp.ne.s32.totalorder %s34, %s50
      %p52 = scmp.eq.s32.totalorder %s26, 0
      %p53 = por %p51, %p52
      %s54 = ssub.s32 %s20, %s27
      %p55 = scmp.eq.s32.totalorder %s54, 0
      %s57 = sadd.s32 %s56, 1
      %s58 = scalar_select %p55, %s56, %s57
      %p61 = pneg %p55
      %p62 = scmp.eq.s32.totalorder %s20, 1
      %p63 = por %p61, %p62
      %p64 = scmp.ne.s32.totalorder %s56, %s59
      %p65 = scmp.eq.s32.totalorder %s20, 0
      %p66 = por %p64, %p65
      %p67 = scmp.ne.s32.totalorder %s56, %s59
      %p68 = scmp.eq.s32.totalorder %s25, 1
      %p69 = por %p67, %p68
      %p70 = scmp.ne.s32.totalorder %s59, %s60
      %p71 = scmp.eq.s32.totalorder %s25, 0
      %p72 = por %p70, %p71
      %p73 = scmp.ne.s32.totalorder %s59, %s60
      %p74 = scmp.eq.s32.totalorder %s26, 1
      %p75 = por %p73, %p74
      %p77 = scmp.ne.s32.totalorder %s60, %s76
      %p78 = scmp.eq.s32.totalorder %s26, 0
      %p79 = por %p77, %p78
      %s80 = ssub.s32 %s20, %s27
      %p81 = scmp.eq.s32.totalorder %s80, 0
      %s83 = sadd.s32 %s82, 1
      %s84 = scalar_select %p81, %s82, %s83
      %p87 = pneg %p81
      %p88 = scmp.eq.s32.totalorder %s20, 1
      %p89 = por %p87, %p88
      %p90 = scmp.ne.s32.totalorder %s82, %s85
      %p91 = scmp.eq.s32.totalorder %s20, 0
      %p92 = por %p90, %p91
      %p93 = scmp.ne.s32.totalorder %s82, %s85
      %p94 = scmp.eq.s32.totalorder %s25, 1
      %p95 = por %p93, %p94
      %p96 = scmp.ne.s32.totalorder %s85, %s86
      %p97 = scmp.eq.s32.totalorder %s25, 0
      %p98 = por %p96, %p97
      %p99 = scmp.ne.s32.totalorder %s85, %s86
      %p100 = scmp.eq.s32.totalorder %s26, 1
      %p101 = por %p99, %p100
      %p103 = scmp.ne.s32.totalorder %s86, %s102
      %p104 = scmp.eq.s32.totalorder %s26, 0
      %p105 = por %p103, %p104
      %s107 = sadd.s32 %s106, 1
      %p110 = scmp.eq.s32.totalorder %s20, 1
      %p111 = scmp.ne.s32.totalorder %s106, %s108
      %p112 = scmp.eq.s32.totalorder %s20, 0
      %p113 = por %p111, %p112
      %p114 = scmp.ne.s32.totalorder %s106, %s108
      %p115 = scmp.eq.s32.totalorder %s25, 1
      %p116 = por %p114, %p115
      %p117 = scmp.ne.s32.totalorder %s108, %s109
      %p118 = scmp.eq.s32.totalorder %s25, 0
      %p119 = por %p117, %p118
      %p120 = scmp.ne.s32.totalorder %s108, %s109
      %p121 = scmp.eq.s32.totalorder %s26, 1
      %p122 = por %p120, %p121
      %p124 = scmp.ne.s32.totalorder %s109, %s123
      %p125 = scmp.eq.s32.totalorder %s26, 0
      %p126 = por %p124, %p125
      %s128 = sadd.s32 %s127, 1
      %p131 = scmp.eq.s32.totalorder %s20, 1
      %p132 = scmp.ne.s32.totalorder %s127, %s129
      %p133 = scmp.eq.s32.totalorder %s20, 0
      %p134 = por %p132, %p133
      %p135 = scmp.ne.s32.totalorder %s127, %s129
      %p136 = scmp.eq.s32.totalorder %s25, 1
      %p137 = por %p135, %p136
      %p138 = scmp.ne.s32.totalorder %s129, %s130
      %p139 = scmp.eq.s32.totalorder %s25, 0
      %p140 = por %p138, %p139
      %p141 = scmp.ne.s32.totalorder %s129, %s130
      %p142 = scmp.eq.s32.totalorder %s26, 1
      %p143 = por %p141, %p142
      %p145 = scmp.ne.s32.totalorder %s130, %s144
      %p146 = scmp.eq.s32.totalorder %s26, 0
      %p147 = por %p145, %p146
      %s148 = ssub.s32 %s20, %s27
      %p149 = scmp.eq.s32.totalorder %s148, 0
      %s151 = sadd.s32 %s150, 1
      %s152 = scalar_select %p149, %s150, %s151
      %p155 = pneg %p149
      %p156 = scmp.eq.s32.totalorder %s20, 1
      %p157 = por %p155, %p156
      %p158 = scmp.ne.s32.totalorder %s150, %s153
      %p159 = scmp.eq.s32.totalorder %s20, 0
      %p160 = por %p158, %p159
      %p161 = scmp.ne.s32.totalorder %s150, %s153
      %p162 = scmp.eq.s32.totalorder %s25, 1
      %p163 = por %p161, %p162
      %p164 = scmp.ne.s32.totalorder %s153, %s154
      %p165 = scmp.eq.s32.totalorder %s25, 0
      %p166 = por %p164, %p165
      %p167 = scmp.ne.s32.totalorder %s153, %s154
      %p168 = scmp.eq.s32.totalorder %s26, 1
      %p169 = por %p167, %p168
      %p171 = scmp.ne.s32.totalorder %s154, %s170
      %p172 = scmp.eq.s32.totalorder %s26, 0
      %p173 = por %p171, %p172
      %p174 = scmp.le.s32.totalorder 1, %s20
      %p175 = scmp.lt.s32.totalorder %s20, 3
      %p176 = pnand %p174, %p175
      %p177 = pneg %p176
      // Predicated region
      $region9: #{tpu_custom_call.1} parent=5 // pred_check
        _
      $region10: #{tpu_custom_call.1} parent=5 // pred_check_branch
        %179 = sbr.rel (%p176) target = $region12
      $region11: #{tpu_custom_call.1} parent=5 // pred_region
        %s180 = ssub.s32 %s20, 1
        // Predicated region
        $region13: #{tpu_custom_call.1} parent=11 // pred_check
          %p181 = pneg %p119
        $region14: #{tpu_custom_call.1} parent=11 // pred_check_branch
          %183 = sbr.rel (%p181) target = $region16
        $region15: #{tpu_custom_call.1} parent=11 // pred_region
          _
        $region16: #{tpu_custom_call.1} parent=11 // pred_fallthru
          _
        // Predicated region
        $region17: #{tpu_custom_call.1} parent=11 // pred_check
          %p184 = pneg %p140
        $region18: #{tpu_custom_call.1} parent=11 // pred_check_branch
          %186 = sbr.rel (%p184) target = $region20
        $region19: #{tpu_custom_call.1} parent=11 // pred_region
          _
        $region20: #{tpu_custom_call.1} parent=11 // pred_fallthru
          _
      $region12: #{tpu_custom_call.1} parent=5 // pred_fallthru
        _
      %p187 = scmp.lt.s32.totalorder %s20, 2
      // Predicated region
      $region21: #{tpu_custom_call.1} parent=5 // pred_check
        %p188 = pneg %p187
      $region22: #{tpu_custom_call.1} parent=5 // pred_check_branch
        %190 = sbr.rel (%p188) target = $region24
      $region23: #{tpu_custom_call.1} parent=5 // pred_region
        // Predicated region
        $region25: #{tpu_custom_call.1} parent=23 // pred_check
          %p191 = pneg %p40
        $region26: #{tpu_custom_call.1} parent=23 // pred_check_branch
          %193 = sbr.rel (%p191) target = $region28
        $region27: #{tpu_custom_call.1} parent=23 // pred_region
          %s194 = sand.u32 %s30, 1
          %s195 = scalar_lea.sflag [#allocation3], %s194
          %s196 = sand.u32 %s30, 1
          %s197 = smul.addr %s196, 128
          %s198 = scalar_lea.vmem [#allocation2], %s197
          %s199 = smul.u32 32, %s20
          %s201 = ssub.s32 2048, 2048
          %202 = vsyncadd %s195, %s201
          %s203 = smul.addr %s199, 64
          %s204 = scalar_lea.hbm %s0, %s203
          %s205 = sshll.u32 %s198, 4
          %s206 = int_to_ptr.vmem [resolvable:$true] %s205
          %211 = dma.hbm_to_vmem [thread:$0]  %s204, 2048, %s206, %s195, 64, 64, 4
        $region28: #{tpu_custom_call.1} parent=23 // pred_fallthru
          _
        // Predicated region
        $region29: #{tpu_custom_call.1} parent=23 // pred_check
          %p212 = pneg %p66
        $region30: #{tpu_custom_call.1} parent=23 // pred_check_branch
          %214 = sbr.rel (%p212) target = $region32
        $region31: #{tpu_custom_call.1} parent=23 // pred_region
          %s215 = sand.u32 %s20, 1
          %s216 = scalar_lea.sflag [#allocation6], %s215
          %s217 = sand.u32 %s56, 1
          %s218 = smul.addr %s217, 128
          %s219 = scalar_lea.vmem [#allocation5], %s218
          %s220 = smul.u32 32, %s20
          %s222 = ssub.s32 2048, 2048
          %223 = vsyncadd %s216, %s222
          %s224 = smul.addr %s220, 64
          %s225 = scalar_lea.hbm %s1, %s224
          %s226 = sshll.u32 %s219, 4
          %s227 = int_to_ptr.vmem [resolvable:$true] %s226
          %232 = dma.hbm_to_vmem [thread:$0]  %s225, 2048, %s227, %s216, 64, 64, 4
        $region32: #{tpu_custom_call.1} parent=23 // pred_fallthru
          _
        // Predicated region
        $region33: #{tpu_custom_call.1} parent=23 // pred_check
          %p233 = pneg %p92
        $region34: #{tpu_custom_call.1} parent=23 // pred_check_branch
          %235 = sbr.rel (%p233) target = $region36
        $region35: #{tpu_custom_call.1} parent=23 // pred_region
          %s236 = sand.u32 %s20, 1
          %s237 = scalar_lea.sflag [#allocation6], %s236
          %s238 = sand.u32 %s82, 1
          %s239 = smul.addr %s238, 128
          %s240 = scalar_lea.vmem [#allocation7], %s239
          %s241 = smul.u32 32, %s20
          %s243 = ssub.s32 2048, 2048
          %244 = vsyncadd %s237, %s243
          %s245 = smul.addr %s241, 64
          %s246 = scalar_lea.hbm %s2, %s245
          %s247 = sshll.u32 %s240, 4
          %s248 = int_to_ptr.vmem [resolvable:$true] %s247
          %253 = dma.hbm_to_vmem [thread:$0]  %s246, 2048, %s248, %s237, 64, 64, 4
        $region36: #{tpu_custom_call.1} parent=23 // pred_fallthru
          _
      $region24: #{tpu_custom_call.1} parent=5 // pred_fallthru
        _
      %p254 = scmp.le.s32.totalorder 1, %s20
      %p255 = scmp.lt.s32.totalorder %s20, 3
      %p256 = pnand %p254, %p255
      %p257 = pneg %p256
      // Predicated region
      $region37: #{tpu_custom_call.1} parent=5 // pred_check
        _
      $region38: #{tpu_custom_call.1} parent=5 // pred_check_branch
        %259 = sbr.rel (%p256) target = $region40
      $region39: #{tpu_custom_call.1} parent=5 // pred_region
        %s260 = ssub.s32 %s20, 1
        %s261 = sand.u32 %s33, 1
        %s262 = scalar_lea.sflag [#allocation3], %s261
        %s263 = sand.u32 %s33, 1
        %s264 = smul.addr %s263, 128
        %s265 = scalar_lea.vmem [#allocation2], %s264
        // Predicated region
        $region41: #{tpu_custom_call.1} parent=39 // pred_check
          %p266 = pneg %p46
        $region42: #{tpu_custom_call.1} parent=39 // pred_check_branch
          %268 = sbr.rel (%p266) target = $region44
        $region43: #{tpu_custom_call.1} parent=39 // pred_region
          %269 = dma.done %s262, 2048
        $region44: #{tpu_custom_call.1} parent=39 // pred_fallthru
          _
        %s270 = sand.u32 %s25, 1
        %s271 = scalar_lea.sflag [#allocation6], %s270
        %s272 = sand.u32 %s59, 1
        %s273 = smul.addr %s272, 128
        %s274 = scalar_lea.vmem [#allocation5], %s273
        // Predicated region
        $region45: #{tpu_custom_call.1} parent=39 // pred_check
          %p275 = pneg %p72
        $region46: #{tpu_custom_call.1} parent=39 // pred_check_branch
          %277 = sbr.rel (%p275) target = $region48
        $region47: #{tpu_custom_call.1} parent=39 // pred_region
          %278 = dma.done %s271, 2048
        $region48: #{tpu_custom_call.1} parent=39 // pred_fallthru
          _
        %s279 = sand.u32 %s25, 1
        %s280 = scalar_lea.sflag [#allocation6], %s279
        %s281 = sand.u32 %s85, 1
        %s282 = smul.addr %s281, 128
        %s283 = scalar_lea.vmem [#allocation7], %s282
        // Predicated region
        $region49: #{tpu_custom_call.1} parent=39 // pred_check
          %p284 = pneg %p98
        $region50: #{tpu_custom_call.1} parent=39 // pred_check_branch
          %286 = sbr.rel (%p284) target = $region52
        $region51: #{tpu_custom_call.1} parent=39 // pred_region
          %287 = dma.done %s280, 2048
        $region52: #{tpu_custom_call.1} parent=39 // pred_fallthru
          _
        %s288 = sand.u32 %s33, 1
        %s289 = scalar_lea.sflag [#allocation3], %s288
        %s290 = sand.u32 %s33, 1
        %s291 = smul.addr %s290, 128
        %s292 = scalar_lea.vmem [#allocation2], %s291
        %p293 = pneg %p46
        %p294 = pneg %p43
        %s295 = sand.u32 %s25, 1
        %s296 = scalar_lea.sflag [#allocation6], %s295
        %s297 = sand.u32 %s59, 1
        %s298 = smul.addr %s297, 128
        %s299 = scalar_lea.vmem [#allocation5], %s298
        %p300 = pneg %p72
        %p301 = pneg %p69
        %s302 = sand.u32 %s25, 1
        %s303 = scalar_lea.sflag [#allocation6], %s302
        %s304 = sand.u32 %s85, 1
        %s305 = smul.addr %s304, 128
        %s306 = scalar_lea.vmem [#allocation7], %s305
        %p307 = pneg %p98
        %p308 = pneg %p95
        %p309 = pneg %p119
        %p310 = pneg %p116
        %p311 = pneg %p140
        %p312 = pneg %p137
        %p313 = pneg %p166
        %p314 = pneg %p163
        %s315 = sand.u32 %s153, 1
        %s316 = scalar_lea.sflag [#allocation4], %s315
        %s317 = sand.u32 %s153, 1
        %s318 = smul.addr %s317, 128
        %s319 = scalar_lea.vmem [#allocation8], %s318
        %s320 = smul.u32 32, %s25
        %s321 = smul.u32 32, %s25
        %s322 = smul.u32 32, %s25
        %s323 = smul.u32 32, %s25
        %v324 = vld [vmem:[%s265] sm:$0xf]
        %v325 = vld [vmem:[%s265 + $0x4] sm:$0xf]
        %v326 = vld [vmem:[%s265 + $0x8] sm:$0xf]
        %v327 = vld [vmem:[%s265 + $0xc] sm:$0xf]
        %v328 = vld [vmem:[%s265 + $0x10] sm:$0xf]
        %v329 = vld [vmem:[%s265 + $0x14] sm:$0xf]
        %v330 = vld [vmem:[%s265 + $0x18] sm:$0xf]
        %v331 = vld [vmem:[%s265 + $0x1c] sm:$0xf]
        %v332 = vld [vmem:[%s265 + $0x20] sm:$0xf]
        %v333 = vld [vmem:[%s265 + $0x24] sm:$0xf]
        %v334 = vld [vmem:[%s265 + $0x28] sm:$0xf]
        %v335 = vld [vmem:[%s265 + $0x2c] sm:$0xf]
        %v336 = vld [vmem:[%s265 + $0x30] sm:$0xf]
        %v337 = vld [vmem:[%s265 + $0x34] sm:$0xf]
        %v338 = vld [vmem:[%s265 + $0x38] sm:$0xf]
        %v339 = vld [vmem:[%s265 + $0x3c] sm:$0xf]
        %v340 = vld [vmem:[%s265 + $0x40] sm:$0xf]
        %v341 = vld [vmem:[%s265 + $0x44] sm:$0xf]
        %v342 = vld [vmem:[%s265 + $0x48] sm:$0xf]
        %v343 = vld [vmem:[%s265 + $0x4c] sm:$0xf]
        %v344 = vld [vmem:[%s265 + $0x50] sm:$0xf]
        %v345 = vld [vmem:[%s265 + $0x54] sm:$0xf]
        %v346 = vld [vmem:[%s265 + $0x58] sm:$0xf]
        %v347 = vld [vmem:[%s265 + $0x5c] sm:$0xf]
        %v348 = vld [vmem:[%s265 + $0x60] sm:$0xf]
        %v349 = vld [vmem:[%s265 + $0x64] sm:$0xf]
        %v350 = vld [vmem:[%s265 + $0x68] sm:$0xf]
        %v351 = vld [vmem:[%s265 + $0x6c] sm:$0xf]
        %v352 = vld [vmem:[%s265 + $0x70] sm:$0xf]
        %v353 = vld [vmem:[%s265 + $0x74] sm:$0xf]
        %v354 = vld [vmem:[%s265 + $0x78] sm:$0xf]
        %v355 = vld [vmem:[%s265 + $0x7c] sm:$0xf]
        %v356 = vunpack.c.l.bf16 %v324
        %v357 = vunpack.c.l.bf16 %v325
        %v358 = vunpack.c.l.bf16 %v326
        %v359 = vunpack.c.l.bf16 %v327
        %v360 = vunpack.c.l.bf16 %v328
        %v361 = vunpack.c.l.bf16 %v329
        %v362 = vunpack.c.l.bf16 %v330
        %v363 = vunpack.c.l.bf16 %v331
        %v364 = vunpack.c.l.bf16 %v332
        %v365 = vunpack.c.l.bf16 %v333
        %v366 = vunpack.c.l.bf16 %v334
        %v367 = vunpack.c.l.bf16 %v335
        %v368 = vunpack.c.l.bf16 %v336
        %v369 = vunpack.c.l.bf16 %v337
        %v370 = vunpack.c.l.bf16 %v338
        %v371 = vunpack.c.l.bf16 %v339
        %v372 = vunpack.c.l.bf16 %v340
        %v373 = vunpack.c.l.bf16 %v341
        %v374 = vunpack.c.l.bf16 %v342
        %v375 = vunpack.c.l.bf16 %v343
        %v376 = vunpack.c.l.bf16 %v344
        %v377 = vunpack.c.l.bf16 %v345
        %v378 = vunpack.c.l.bf16 %v346
        %v379 = vunpack.c.l.bf16 %v347
        %v380 = vunpack.c.l.bf16 %v348
        %v381 = vunpack.c.l.bf16 %v349
        %v382 = vunpack.c.l.bf16 %v350
        %v383 = vunpack.c.l.bf16 %v351
        %v384 = vunpack.c.l.bf16 %v352
        %v385 = vunpack.c.l.bf16 %v353
        %v386 = vunpack.c.l.bf16 %v354
        %v387 = vunpack.c.l.bf16 %v355
        %v388 = vld [vmem:[%s283] sm:$0xf]
        %v389 = vld [vmem:[%s283 + $0x4] sm:$0xf]
        %v390 = vld [vmem:[%s283 + $0x8] sm:$0xf]
        %v391 = vld [vmem:[%s283 + $0xc] sm:$0xf]
        %v392 = vld [vmem:[%s283 + $0x10] sm:$0xf]
        %v393 = vld [vmem:[%s283 + $0x14] sm:$0xf]
        %v394 = vld [vmem:[%s283 + $0x18] sm:$0xf]
        %v395 = vld [vmem:[%s283 + $0x1c] sm:$0xf]
        %v396 = vld [vmem:[%s283 + $0x20] sm:$0xf]
        %v397 = vld [vmem:[%s283 + $0x24] sm:$0xf]
        %v398 = vld [vmem:[%s283 + $0x28] sm:$0xf]
        %v399 = vld [vmem:[%s283 + $0x2c] sm:$0xf]
        %v400 = vld [vmem:[%s283 + $0x30] sm:$0xf]
        %v401 = vld [vmem:[%s283 + $0x34] sm:$0xf]
        %v402 = vld [vmem:[%s283 + $0x38] sm:$0xf]
        %v403 = vld [vmem:[%s283 + $0x3c] sm:$0xf]
        %v404 = vld [vmem:[%s283 + $0x40] sm:$0xf]
        %v405 = vld [vmem:[%s283 + $0x44] sm:$0xf]
        %v406 = vld [vmem:[%s283 + $0x48] sm:$0xf]
        %v407 = vld [vmem:[%s283 + $0x4c] sm:$0xf]
        %v408 = vld [vmem:[%s283 + $0x50] sm:$0xf]
        %v409 = vld [vmem:[%s283 + $0x54] sm:$0xf]
        %v410 = vld [vmem:[%s283 + $0x58] sm:$0xf]
        %v411 = vld [vmem:[%s283 + $0x5c] sm:$0xf]
        %v412 = vld [vmem:[%s283 + $0x60] sm:$0xf]
        %v413 = vld [vmem:[%s283 + $0x64] sm:$0xf]
        %v414 = vld [vmem:[%s283 + $0x68] sm:$0xf]
        %v415 = vld [vmem:[%s283 + $0x6c] sm:$0xf]
        %v416 = vld [vmem:[%s283 + $0x70] sm:$0xf]
        %v417 = vld [vmem:[%s283 + $0x74] sm:$0xf]
        %v418 = vld [vmem:[%s283 + $0x78] sm:$0xf]
        %v419 = vld [vmem:[%s283 + $0x7c] sm:$0xf]
        %v420 = vunpack.c.l.bf16 %v388
        %v421 = vunpack.c.l.bf16 %v389
        %v422 = vunpack.c.l.bf16 %v390
        %v423 = vunpack.c.l.bf16 %v391
        %v424 = vunpack.c.l.bf16 %v392
        %v425 = vunpack.c.l.bf16 %v393
        %v426 = vunpack.c.l.bf16 %v394
        %v427 = vunpack.c.l.bf16 %v395
        %v428 = vunpack.c.l.bf16 %v396
        %v429 = vunpack.c.l.bf16 %v397
        %v430 = vunpack.c.l.bf16 %v398
        %v431 = vunpack.c.l.bf16 %v399
        %v432 = vunpack.c.l.bf16 %v400
        %v433 = vunpack.c.l.bf16 %v401
        %v434 = vunpack.c.l.bf16 %v402
        %v435 = vunpack.c.l.bf16 %v403
        %v436 = vunpack.c.l.bf16 %v404
        %v437 = vunpack.c.l.bf16 %v405
        %v438 = vunpack.c.l.bf16 %v406
        %v439 = vunpack.c.l.bf16 %v407
        %v440 = vunpack.c.l.bf16 %v408
        %v441 = vunpack.c.l.bf16 %v409
        %v442 = vunpack.c.l.bf16 %v410
        %v443 = vunpack.c.l.bf16 %v411
        %v444 = vunpack.c.l.bf16 %v412
        %v445 = vunpack.c.l.bf16 %v413
        %v446 = vunpack.c.l.bf16 %v414
        %v447 = vunpack.c.l.bf16 %v415
        %v448 = vunpack.c.l.bf16 %v416
        %v449 = vunpack.c.l.bf16 %v417
        %v450 = vunpack.c.l.bf16 %v418
        %v451 = vunpack.c.l.bf16 %v419
        %v452 = vadd.f32 %v356, %v420
        %v453 = vadd.f32 %v357, %v421
        %v454 = vadd.f32 %v358, %v422
        %v455 = vadd.f32 %v359, %v423
        %v456 = vadd.f32 %v360, %v424
        %v457 = vadd.f32 %v361, %v425
        %v458 = vadd.f32 %v362, %v426
        %v459 = vadd.f32 %v363, %v427
        %v460 = vadd.f32 %v364, %v428
        %v461 = vadd.f32 %v365, %v429
        %v462 = vadd.f32 %v366, %v430
        %v463 = vadd.f32 %v367, %v431
        %v464 = vadd.f32 %v368, %v432
        %v465 = vadd.f32 %v369, %v433
        %v466 = vadd.f32 %v370, %v434
        %v467 = vadd.f32 %v371, %v435
        %v468 = vadd.f32 %v372, %v436
        %v469 = vadd.f32 %v373, %v437
        %v470 = vadd.f32 %v374, %v438
        %v471 = vadd.f32 %v375, %v439
        %v472 = vadd.f32 %v376, %v440
        %v473 = vadd.f32 %v377, %v441
        %v474 = vadd.f32 %v378, %v442
        %v475 = vadd.f32 %v379, %v443
        %v476 = vadd.f32 %v380, %v444
        %v477 = vadd.f32 %v381, %v445
        %v478 = vadd.f32 %v382, %v446
        %v479 = vadd.f32 %v383, %v447
        %v480 = vadd.f32 %v384, %v448
        %v481 = vadd.f32 %v385, %v449
        %v482 = vadd.f32 %v386, %v450
        %v483 = vadd.f32 %v387, %v451
        %v484 = vld [vmem:[%s274] sm:$0xf]
        %v485 = vld [vmem:[%s274 + $0x4] sm:$0xf]
        %v486 = vld [vmem:[%s274 + $0x8] sm:$0xf]
        %v487 = vld [vmem:[%s274 + $0xc] sm:$0xf]
        %v488 = vld [vmem:[%s274 + $0x10] sm:$0xf]
        %v489 = vld [vmem:[%s274 + $0x14] sm:$0xf]
        %v490 = vld [vmem:[%s274 + $0x18] sm:$0xf]
        %v491 = vld [vmem:[%s274 + $0x1c] sm:$0xf]
        %v492 = vld [vmem:[%s274 + $0x20] sm:$0xf]
        %v493 = vld [vmem:[%s274 + $0x24] sm:$0xf]
        %v494 = vld [vmem:[%s274 + $0x28] sm:$0xf]
        %v495 = vld [vmem:[%s274 + $0x2c] sm:$0xf]
        %v496 = vld [vmem:[%s274 + $0x30] sm:$0xf]
        %v497 = vld [vmem:[%s274 + $0x34] sm:$0xf]
        %v498 = vld [vmem:[%s274 + $0x38] sm:$0xf]
        %v499 = vld [vmem:[%s274 + $0x3c] sm:$0xf]
        %v500 = vld [vmem:[%s274 + $0x40] sm:$0xf]
        %v501 = vld [vmem:[%s274 + $0x44] sm:$0xf]
        %v502 = vld [vmem:[%s274 + $0x48] sm:$0xf]
        %v503 = vld [vmem:[%s274 + $0x4c] sm:$0xf]
        %v504 = vld [vmem:[%s274 + $0x50] sm:$0xf]
        %v505 = vld [vmem:[%s274 + $0x54] sm:$0xf]
        %v506 = vld [vmem:[%s274 + $0x58] sm:$0xf]
        %v507 = vld [vmem:[%s274 + $0x5c] sm:$0xf]
        %v508 = vld [vmem:[%s274 + $0x60] sm:$0xf]
        %v509 = vld [vmem:[%s274 + $0x64] sm:$0xf]
        %v510 = vld [vmem:[%s274 + $0x68] sm:$0xf]
        %v511 = vld [vmem:[%s274 + $0x6c] sm:$0xf]
        %v512 = vld [vmem:[%s274 + $0x70] sm:$0xf]
        %v513 = vld [vmem:[%s274 + $0x74] sm:$0xf]
        %v514 = vld [vmem:[%s274 + $0x78] sm:$0xf]
        %v515 = vld [vmem:[%s274 + $0x7c] sm:$0xf]
        %v516 = vunpack.c.l.bf16 %v484
        %v517 = vunpack.c.l.bf16 %v485
        %v518 = vunpack.c.l.bf16 %v486
        %v519 = vunpack.c.l.bf16 %v487
        %v520 = vunpack.c.l.bf16 %v488
        %v521 = vunpack.c.l.bf16 %v489
        %v522 = vunpack.c.l.bf16 %v490
        %v523 = vunpack.c.l.bf16 %v491
        %v524 = vunpack.c.l.bf16 %v492
        %v525 = vunpack.c.l.bf16 %v493
        %v526 = vunpack.c.l.bf16 %v494
        %v527 = vunpack.c.l.bf16 %v495
        %v528 = vunpack.c.l.bf16 %v496
        %v529 = vunpack.c.l.bf16 %v497
        %v530 = vunpack.c.l.bf16 %v498
        %v531 = vunpack.c.l.bf16 %v499
        %v532 = vunpack.c.l.bf16 %v500
        %v533 = vunpack.c.l.bf16 %v501
        %v534 = vunpack.c.l.bf16 %v502
        %v535 = vunpack.c.l.bf16 %v503
        %v536 = vunpack.c.l.bf16 %v504
        %v537 = vunpack.c.l.bf16 %v505
        %v538 = vunpack.c.l.bf16 %v506
        %v539 = vunpack.c.l.bf16 %v507
        %v540 = vunpack.c.l.bf16 %v508
        %v541 = vunpack.c.l.bf16 %v509
        %v542 = vunpack.c.l.bf16 %v510
        %v543 = vunpack.c.l.bf16 %v511
        %v544 = vunpack.c.l.bf16 %v512
        %v545 = vunpack.c.l.bf16 %v513
        %v546 = vunpack.c.l.bf16 %v514
        %v547 = vunpack.c.l.bf16 %v515
        %v548 = vadd.f32 %v452, %v516
        %v549 = vadd.f32 %v453, %v517
        %v550 = vadd.f32 %v454, %v518
        %v551 = vadd.f32 %v455, %v519
        %v552 = vadd.f32 %v456, %v520
        %v553 = vadd.f32 %v457, %v521
        %v554 = vadd.f32 %v458, %v522
        %v555 = vadd.f32 %v459, %v523
        %v556 = vadd.f32 %v460, %v524
        %v557 = vadd.f32 %v461, %v525
        %v558 = vadd.f32 %v462, %v526
        %v559 = vadd.f32 %v463, %v527
        %v560 = vadd.f32 %v464, %v528
        %v561 = vadd.f32 %v465, %v529
        %v562 = vadd.f32 %v466, %v530
        %v563 = vadd.f32 %v467, %v531
        %v564 = vadd.f32 %v468, %v532
        %v565 = vadd.f32 %v469, %v533
        %v566 = vadd.f32 %v470, %v534
        %v567 = vadd.f32 %v471, %v535
        %v568 = vadd.f32 %v472, %v536
        %v569 = vadd.f32 %v473, %v537
        %v570 = vadd.f32 %v474, %v538
        %v571 = vadd.f32 %v475, %v539
        %v572 = vadd.f32 %v476, %v540
        %v573 = vadd.f32 %v477, %v541
        %v574 = vadd.f32 %v478, %v542
        %v575 = vadd.f32 %v479, %v543
        %v576 = vadd.f32 %v480, %v544
        %v577 = vadd.f32 %v481, %v545
        %v578 = vadd.f32 %v482, %v546
        %v579 = vadd.f32 %v483, %v547
        %v580 = vld [vmem:[%s3] sm:$0x1]
        %v581 = vld [vmem:[%s4] sm:$0x1]
        %582 = vadd.xlane.f32.xlu0 %v548
        %v583 = vpop.xlane.xlu0 %582
        %584 = vadd.xlane.f32.xlu0 %v549
        %v585 = vpop.xlane.xlu0 %584
        %586 = vadd.xlane.f32.xlu0 %v550
        %v587 = vpop.xlane.xlu0 %586
        %588 = vadd.xlane.f32.xlu0 %v551
        %v589 = vpop.xlane.xlu0 %588
        %590 = vadd.xlane.f32.xlu0 %v552
        %v591 = vpop.xlane.xlu0 %590
        %592 = vadd.xlane.f32.xlu0 %v553
        %v593 = vpop.xlane.xlu0 %592
        %594 = vadd.xlane.f32.xlu0 %v554
        %v595 = vpop.xlane.xlu0 %594
        %596 = vadd.xlane.f32.xlu0 %v555
        %v597 = vpop.xlane.xlu0 %596
        %598 = vadd.xlane.f32.xlu0 %v556
        %v599 = vpop.xlane.xlu0 %598
        %600 = vadd.xlane.f32.xlu0 %v557
        %v601 = vpop.xlane.xlu0 %600
        %602 = vadd.xlane.f32.xlu0 %v558
        %v603 = vpop.xlane.xlu0 %602
        %604 = vadd.xlane.f32.xlu0 %v559
        %v605 = vpop.xlane.xlu0 %604
        %606 = vadd.xlane.f32.xlu0 %v560
        %v607 = vpop.xlane.xlu0 %606
        %608 = vadd.xlane.f32.xlu0 %v561
        %v609 = vpop.xlane.xlu0 %608
        %610 = vadd.xlane.f32.xlu0 %v562
        %v611 = vpop.xlane.xlu0 %610
        %612 = vadd.xlane.f32.xlu0 %v563
        %v613 = vpop.xlane.xlu0 %612
        %614 = vadd.xlane.f32.xlu0 %v564
        %v615 = vpop.xlane.xlu0 %614
        %616 = vadd.xlane.f32.xlu0 %v565
        %v617 = vpop.xlane.xlu0 %616
        %618 = vadd.xlane.f32.xlu0 %v566
        %v619 = vpop.xlane.xlu0 %618
        %620 = vadd.xlane.f32.xlu0 %v567
        %v621 = vpop.xlane.xlu0 %620
        %622 = vadd.xlane.f32.xlu0 %v568
        %v623 = vpop.xlane.xlu0 %622
        %624 = vadd.xlane.f32.xlu0 %v569
        %v625 = vpop.xlane.xlu0 %624
        %626 = vadd.xlane.f32.xlu0 %v570
        %v627 = vpop.xlane.xlu0 %626
        %628 = vadd.xlane.f32.xlu0 %v571
        %v629 = vpop.xlane.xlu0 %628
        %630 = vadd.xlane.f32.xlu0 %v572
        %v631 = vpop.xlane.xlu0 %630
        %632 = vadd.xlane.f32.xlu0 %v573
        %v633 = vpop.xlane.xlu0 %632
        %634 = vadd.xlane.f32.xlu0 %v574
        %v635 = vpop.xlane.xlu0 %634
        %636 = vadd.xlane.f32.xlu0 %v575
        %v637 = vpop.xlane.xlu0 %636
        %638 = vadd.xlane.f32.xlu0 %v576
        %v639 = vpop.xlane.xlu0 %638
        %640 = vadd.xlane.f32.xlu0 %v577
        %v641 = vpop.xlane.xlu0 %640
        %642 = vadd.xlane.f32.xlu0 %v578
        %v643 = vpop.xlane.xlu0 %642
        %644 = vadd.xlane.f32.xlu0 %v579
        %v645 = vpop.xlane.xlu0 %644
        %v646 = vrcp.pop 128.0
        %v647 = vmul.f32 %v583, %v646
        %v648 = vmul.f32 %v585, %v646
        %v649 = vmul.f32 %v587, %v646
        %v650 = vmul.f32 %v589, %v646
        %v651 = vmul.f32 %v591, %v646
        %v652 = vmul.f32 %v593, %v646
        %v653 = vmul.f32 %v595, %v646
        %v654 = vmul.f32 %v597, %v646
        %v655 = vmul.f32 %v599, %v646
        %v656 = vmul.f32 %v601, %v646
        %v657 = vmul.f32 %v603, %v646
        %v658 = vmul.f32 %v605, %v646
        %v659 = vmul.f32 %v607, %v646
        %v660 = vmul.f32 %v609, %v646
        %v661 = vmul.f32 %v611, %v646
        %v662 = vmul.f32 %v613, %v646
        %v663 = vmul.f32 %v615, %v646
        %v664 = vmul.f32 %v617, %v646
        %v665 = vmul.f32 %v619, %v646
        %v666 = vmul.f32 %v621, %v646
        %v667 = vmul.f32 %v623, %v646
        %v668 = vmul.f32 %v625, %v646
        %v669 = vmul.f32 %v627, %v646
        %v670 = vmul.f32 %v629, %v646
        %v671 = vmul.f32 %v631, %v646
        %v672 = vmul.f32 %v633, %v646
        %v673 = vmul.f32 %v635, %v646
        %v674 = vmul.f32 %v637, %v646
        %v675 = vmul.f32 %v639, %v646
        %v676 = vmul.f32 %v641, %v646
        %v677 = vmul.f32 %v643, %v646
        %v678 = vmul.f32 %v645, %v646
        %v679 = vsub.f32 %v548, %v647
        %v680 = vsub.f32 %v549, %v648
        %v681 = vsub.f32 %v550, %v649
        %v682 = vsub.f32 %v551, %v650
        %v683 = vsub.f32 %v552, %v651
        %v684 = vsub.f32 %v553, %v652
        %v685 = vsub.f32 %v554, %v653
        %v686 = vsub.f32 %v555, %v654
        %v687 = vsub.f32 %v556, %v655
        %v688 = vsub.f32 %v557, %v656
        %v689 = vsub.f32 %v558, %v657
        %v690 = vsub.f32 %v559, %v658
        %v691 = vsub.f32 %v560, %v659
        %v692 = vsub.f32 %v561, %v660
        %v693 = vsub.f32 %v562, %v661
        %v694 = vsub.f32 %v563, %v662
        %v695 = vsub.f32 %v564, %v663
        %v696 = vsub.f32 %v565, %v664
        %v697 = vsub.f32 %v566, %v665
        %v698 = vsub.f32 %v567, %v666
        %v699 = vsub.f32 %v568, %v667
        %v700 = vsub.f32 %v569, %v668
        %v701 = vsub.f32 %v570, %v669
        %v702 = vsub.f32 %v571, %v670
        %v703 = vsub.f32 %v572, %v671
        %v704 = vsub.f32 %v573, %v672
        %v705 = vsub.f32 %v574, %v673
        %v706 = vsub.f32 %v575, %v674
        %v707 = vsub.f32 %v576, %v675
        %v708 = vsub.f32 %v577, %v676
        %v709 = vsub.f32 %v578, %v677
        %v710 = vsub.f32 %v579, %v678
        %v711 = vmul.f32 %v679, %v679
        %v712 = vmul.f32 %v680, %v680
        %v713 = vmul.f32 %v681, %v681
        %v714 = vmul.f32 %v682, %v682
        %v715 = vmul.f32 %v683, %v683
        %v716 = vmul.f32 %v684, %v684
        %v717 = vmul.f32 %v685, %v685
        %v718 = vmul.f32 %v686, %v686
        %v719 = vmul.f32 %v687, %v687
        %v720 = vmul.f32 %v688, %v688
        %v721 = vmul.f32 %v689, %v689
        %v722 = vmul.f32 %v690, %v690
        %v723 = vmul.f32 %v691, %v691
        %v724 = vmul.f32 %v692, %v692
        %v725 = vmul.f32 %v693, %v693
        %v726 = vmul.f32 %v694, %v694
        %v727 = vmul.f32 %v695, %v695
        %v728 = vmul.f32 %v696, %v696
        %v729 = vmul.f32 %v697, %v697
        %v730 = vmul.f32 %v698, %v698
        %v731 = vmul.f32 %v699, %v699
        %v732 = vmul.f32 %v700, %v700
        %v733 = vmul.f32 %v701, %v701
        %v734 = vmul.f32 %v702, %v702
        %v735 = vmul.f32 %v703, %v703
        %v736 = vmul.f32 %v704, %v704
        %v737 = vmul.f32 %v705, %v705
        %v738 = vmul.f32 %v706, %v706
        %v739 = vmul.f32 %v707, %v707
        %v740 = vmul.f32 %v708, %v708
        %v741 = vmul.f32 %v709, %v709
        %v742 = vmul.f32 %v710, %v710
        %743 = vadd.xlane.f32.xlu0 %v711
        %v744 = vpop.xlane.xlu0 %743
        %745 = vadd.xlane.f32.xlu0 %v712
        %v746 = vpop.xlane.xlu0 %745
        %747 = vadd.xlane.f32.xlu0 %v713
        %v748 = vpop.xlane.xlu0 %747
        %749 = vadd.xlane.f32.xlu0 %v714
        %v750 = vpop.xlane.xlu0 %749
        %751 = vadd.xlane.f32.xlu0 %v715
        %v752 = vpop.xlane.xlu0 %751
        %753 = vadd.xlane.f32.xlu0 %v716
        %v754 = vpop.xlane.xlu0 %753
        %755 = vadd.xlane.f32.xlu0 %v717
        %v756 = vpop.xlane.xlu0 %755
        %757 = vadd.xlane.f32.xlu0 %v718
        %v758 = vpop.xlane.xlu0 %757
        %759 = vadd.xlane.f32.xlu0 %v719
        %v760 = vpop.xlane.xlu0 %759
        %761 = vadd.xlane.f32.xlu0 %v720
        %v762 = vpop.xlane.xlu0 %761
        %763 = vadd.xlane.f32.xlu0 %v721
        %v764 = vpop.xlane.xlu0 %763
        %765 = vadd.xlane.f32.xlu0 %v722
        %v766 = vpop.xlane.xlu0 %765
        %767 = vadd.xlane.f32.xlu0 %v723
        %v768 = vpop.xlane.xlu0 %767
        %769 = vadd.xlane.f32.xlu0 %v724
        %v770 = vpop.xlane.xlu0 %769
        %771 = vadd.xlane.f32.xlu0 %v725
        %v772 = vpop.xlane.xlu0 %771
        %773 = vadd.xlane.f32.xlu0 %v726
        %v774 = vpop.xlane.xlu0 %773
        %775 = vadd.xlane.f32.xlu0 %v727
        %v776 = vpop.xlane.xlu0 %775
        %777 = vadd.xlane.f32.xlu0 %v728
        %v778 = vpop.xlane.xlu0 %777
        %779 = vadd.xlane.f32.xlu0 %v729
        %v780 = vpop.xlane.xlu0 %779
        %781 = vadd.xlane.f32.xlu0 %v730
        %v782 = vpop.xlane.xlu0 %781
        %783 = vadd.xlane.f32.xlu0 %v731
        %v784 = vpop.xlane.xlu0 %783
        %785 = vadd.xlane.f32.xlu0 %v732
        %v786 = vpop.xlane.xlu0 %785
        %787 = vadd.xlane.f32.xlu0 %v733
        %v788 = vpop.xlane.xlu0 %787
        %789 = vadd.xlane.f32.xlu0 %v734
        %v790 = vpop.xlane.xlu0 %789
        %791 = vadd.xlane.f32.xlu0 %v735
        %v792 = vpop.xlane.xlu0 %791
        %793 = vadd.xlane.f32.xlu0 %v736
        %v794 = vpop.xlane.xlu0 %793
        %795 = vadd.xlane.f32.xlu0 %v737
        %v796 = vpop.xlane.xlu0 %795
        %797 = vadd.xlane.f32.xlu0 %v738
        %v798 = vpop.xlane.xlu0 %797
        %799 = vadd.xlane.f32.xlu0 %v739
        %v800 = vpop.xlane.xlu0 %799
        %801 = vadd.xlane.f32.xlu0 %v740
        %v802 = vpop.xlane.xlu0 %801
        %803 = vadd.xlane.f32.xlu0 %v741
        %v804 = vpop.xlane.xlu0 %803
        %805 = vadd.xlane.f32.xlu0 %v742
        %v806 = vpop.xlane.xlu0 %805
        %v807 = vmul.f32 %v744, %v646
        %v808 = vmul.f32 %v746, %v646
        %v809 = vmul.f32 %v748, %v646
        %v810 = vmul.f32 %v750, %v646
        %v811 = vmul.f32 %v752, %v646
        %v812 = vmul.f32 %v754, %v646
        %v813 = vmul.f32 %v756, %v646
        %v814 = vmul.f32 %v758, %v646
        %v815 = vmul.f32 %v760, %v646
        %v816 = vmul.f32 %v762, %v646
        %v817 = vmul.f32 %v764, %v646
        %v818 = vmul.f32 %v766, %v646
        %v819 = vmul.f32 %v768, %v646
        %v820 = vmul.f32 %v770, %v646
        %v821 = vmul.f32 %v772, %v646
        %v822 = vmul.f32 %v774, %v646
        %v823 = vmul.f32 %v776, %v646
        %v824 = vmul.f32 %v778, %v646
        %v825 = vmul.f32 %v780, %v646
        %v826 = vmul.f32 %v782, %v646
        %v827 = vmul.f32 %v784, %v646
        %v828 = vmul.f32 %v786, %v646
        %v829 = vmul.f32 %v788, %v646
        %v830 = vmul.f32 %v790, %v646
        %v831 = vmul.f32 %v792, %v646
        %v832 = vmul.f32 %v794, %v646
        %v833 = vmul.f32 %v796, %v646
        %v834 = vmul.f32 %v798, %v646
        %v835 = vmul.f32 %v800, %v646
        %v836 = vmul.f32 %v802, %v646
        %v837 = vmul.f32 %v804, %v646
        %v838 = vmul.f32 %v806, %v646
        %v839 = vadd.f32 %v807, 1e-05
        %v840 = vadd.f32 %v808, 1e-05
        %v841 = vadd.f32 %v809, 1e-05
        %v842 = vadd.f32 %v810, 1e-05
        %v843 = vadd.f32 %v811, 1e-05
        %v844 = vadd.f32 %v812, 1e-05
        %v845 = vadd.f32 %v813, 1e-05
        %v846 = vadd.f32 %v814, 1e-05
        %v847 = vadd.f32 %v815, 1e-05
        %v848 = vadd.f32 %v816, 1e-05
        %v849 = vadd.f32 %v817, 1e-05
        %v850 = vadd.f32 %v818, 1e-05
        %v851 = vadd.f32 %v819, 1e-05
        %v852 = vadd.f32 %v820, 1e-05
        %v853 = vadd.f32 %v821, 1e-05
        %v854 = vadd.f32 %v822, 1e-05
        %v855 = vadd.f32 %v823, 1e-05
        %v856 = vadd.f32 %v824, 1e-05
        %v857 = vadd.f32 %v825, 1e-05
        %v858 = vadd.f32 %v826, 1e-05
        %v859 = vadd.f32 %v827, 1e-05
        %v860 = vadd.f32 %v828, 1e-05
        %v861 = vadd.f32 %v829, 1e-05
        %v862 = vadd.f32 %v830, 1e-05
        %v863 = vadd.f32 %v831, 1e-05
        %v864 = vadd.f32 %v832, 1e-05
        %v865 = vadd.f32 %v833, 1e-05
        %v866 = vadd.f32 %v834, 1e-05
        %v867 = vadd.f32 %v835, 1e-05
        %v868 = vadd.f32 %v836, 1e-05
        %v869 = vadd.f32 %v837, 1e-05
        %v870 = vadd.f32 %v838, 1e-05
        %v871 = vrsqrt.pop %v839
        %v872 = vrsqrt.pop %v840
        %v873 = vrsqrt.pop %v841
        %v874 = vrsqrt.pop %v842
        %v875 = vrsqrt.pop %v843
        %v876 = vrsqrt.pop %v844
        %v877 = vrsqrt.pop %v845
        %v878 = vrsqrt.pop %v846
        %v879 = vrsqrt.pop %v847
        %v880 = vrsqrt.pop %v848
        %v881 = vrsqrt.pop %v849
        %v882 = vrsqrt.pop %v850
        %v883 = vrsqrt.pop %v851
        %v884 = vrsqrt.pop %v852
        %v885 = vrsqrt.pop %v853
        %v886 = vrsqrt.pop %v854
        %v887 = vrsqrt.pop %v855
        %v888 = vrsqrt.pop %v856
        %v889 = vrsqrt.pop %v857
        %v890 = vrsqrt.pop %v858
        %v891 = vrsqrt.pop %v859
        %v892 = vrsqrt.pop %v860
        %v893 = vrsqrt.pop %v861
        %v894 = vrsqrt.pop %v862
        %v895 = vrsqrt.pop %v863
        %v896 = vrsqrt.pop %v864
        %v897 = vrsqrt.pop %v865
        %v898 = vrsqrt.pop %v866
        %v899 = vrsqrt.pop %v867
        %v900 = vrsqrt.pop %v868
        %v901 = vrsqrt.pop %v869
        %v902 = vrsqrt.pop %v870
        %v903 = vmul.f32 %v679, %v871
        %v904 = vmul.f32 %v680, %v872
        %v905 = vmul.f32 %v681, %v873
        %v906 = vmul.f32 %v682, %v874
        %v907 = vmul.f32 %v683, %v875
        %v908 = vmul.f32 %v684, %v876
        %v909 = vmul.f32 %v685, %v877
        %v910 = vmul.f32 %v686, %v878
        %v911 = vmul.f32 %v687, %v879
        %v912 = vmul.f32 %v688, %v880
        %v913 = vmul.f32 %v689, %v881
        %v914 = vmul.f32 %v690, %v882
        %v915 = vmul.f32 %v691, %v883
        %v916 = vmul.f32 %v692, %v884
        %v917 = vmul.f32 %v693, %v885
        %v918 = vmul.f32 %v694, %v886
        %v919 = vmul.f32 %v695, %v887
        %v920 = vmul.f32 %v696, %v888
        %v921 = vmul.f32 %v697, %v889
        %v922 = vmul.f32 %v698, %v890
        %v923 = vmul.f32 %v699, %v891
        %v924 = vmul.f32 %v700, %v892
        %v925 = vmul.f32 %v701, %v893
        %v926 = vmul.f32 %v702, %v894
        %v927 = vmul.f32 %v703, %v895
        %v928 = vmul.f32 %v704, %v896
        %v929 = vmul.f32 %v705, %v897
        %v930 = vmul.f32 %v706, %v898
        %v931 = vmul.f32 %v707, %v899
        %v932 = vmul.f32 %v708, %v900
        %v933 = vmul.f32 %v709, %v901
        %v934 = vmul.f32 %v710, %v902
        %v936 = vlaneseq
        %v937 = vshrl.u32 %v936, 7
        %v938 = vsub.s32 0, %v937
        %v939 = vrot.slane %v580, %v938
        %v941 = vmul.f32 %v903, %v939
        %v942 = vmul.f32 %v904, %v939
        %v943 = vmul.f32 %v905, %v939
        %v944 = vmul.f32 %v906, %v939
        %v945 = vmul.f32 %v907, %v939
        %v946 = vmul.f32 %v908, %v939
        %v947 = vmul.f32 %v909, %v939
        %v948 = vmul.f32 %v910, %v939
        %v949 = vmul.f32 %v911, %v939
        %v950 = vmul.f32 %v912, %v939
        %v951 = vmul.f32 %v913, %v939
        %v952 = vmul.f32 %v914, %v939
        %v953 = vmul.f32 %v915, %v939
        %v954 = vmul.f32 %v916, %v939
        %v955 = vmul.f32 %v917, %v939
        %v956 = vmul.f32 %v918, %v939
        %v957 = vmul.f32 %v919, %v939
        %v958 = vmul.f32 %v920, %v939
        %v959 = vmul.f32 %v921, %v939
        %v960 = vmul.f32 %v922, %v939
        %v961 = vmul.f32 %v923, %v939
        %v962 = vmul.f32 %v924, %v939
        %v963 = vmul.f32 %v925, %v939
        %v964 = vmul.f32 %v926, %v939
        %v965 = vmul.f32 %v927, %v939
        %v966 = vmul.f32 %v928, %v939
        %v967 = vmul.f32 %v929, %v939
        %v968 = vmul.f32 %v930, %v939
        %v969 = vmul.f32 %v931, %v939
        %v970 = vmul.f32 %v932, %v939
        %v971 = vmul.f32 %v933, %v939
        %v972 = vmul.f32 %v934, %v939
        %v974 = vlaneseq
        %v975 = vshrl.u32 %v974, 7
        %v976 = vsub.s32 0, %v975
        %v977 = vrot.slane %v581, %v976
        %v979 = vadd.f32 %v941, %v977
        %v980 = vadd.f32 %v942, %v977
        %v981 = vadd.f32 %v943, %v977
        %v982 = vadd.f32 %v944, %v977
        %v983 = vadd.f32 %v945, %v977
        %v984 = vadd.f32 %v946, %v977
        %v985 = vadd.f32 %v947, %v977
        %v986 = vadd.f32 %v948, %v977
        %v987 = vadd.f32 %v949, %v977
        %v988 = vadd.f32 %v950, %v977
        %v989 = vadd.f32 %v951, %v977
        %v990 = vadd.f32 %v952, %v977
        %v991 = vadd.f32 %v953, %v977
        %v992 = vadd.f32 %v954, %v977
        %v993 = vadd.f32 %v955, %v977
        %v994 = vadd.f32 %v956, %v977
        %v995 = vadd.f32 %v957, %v977
        %v996 = vadd.f32 %v958, %v977
        %v997 = vadd.f32 %v959, %v977
        %v998 = vadd.f32 %v960, %v977
        %v999 = vadd.f32 %v961, %v977
        %v1000 = vadd.f32 %v962, %v977
        %v1001 = vadd.f32 %v963, %v977
        %v1002 = vadd.f32 %v964, %v977
        %v1003 = vadd.f32 %v965, %v977
        %v1004 = vadd.f32 %v966, %v977
        %v1005 = vadd.f32 %v967, %v977
        %v1006 = vadd.f32 %v968, %v977
        %v1007 = vadd.f32 %v969, %v977
        %v1008 = vadd.f32 %v970, %v977
        %v1009 = vadd.f32 %v971, %v977
        %v1010 = vadd.f32 %v972, %v977
        %v1011 = vpack.c.bf16 %v980, %v979
        %v1012 = vpack.c.bf16 %v982, %v981
        %v1013 = vpack.c.bf16 %v984, %v983
        %v1014 = vpack.c.bf16 %v986, %v985
        %v1015 = vpack.c.bf16 %v988, %v987
        %v1016 = vpack.c.bf16 %v990, %v989
        %v1017 = vpack.c.bf16 %v992, %v991
        %v1018 = vpack.c.bf16 %v994, %v993
        %v1019 = vpack.c.bf16 %v996, %v995
        %v1020 = vpack.c.bf16 %v998, %v997
        %v1021 = vpack.c.bf16 %v1000, %v999
        %v1022 = vpack.c.bf16 %v1002, %v1001
        %v1023 = vpack.c.bf16 %v1004, %v1003
        %v1024 = vpack.c.bf16 %v1006, %v1005
        %v1025 = vpack.c.bf16 %v1008, %v1007
        %v1026 = vpack.c.bf16 %v1010, %v1009
        %v1043 = vunpack.c.l.b16 %v1011
        %v1044 = vunpack.c.h.b16 %v1011
        %v1045 = vunpack.c.l.b16 %v1012
        %v1046 = vunpack.c.h.b16 %v1012
        %v1047 = vunpack.c.l.b16 %v1013
        %v1048 = vunpack.c.h.b16 %v1013
        %v1049 = vunpack.c.l.b16 %v1014
        %v1050 = vunpack.c.h.b16 %v1014
        %v1051 = vunpack.c.l.b16 %v1015
        %v1052 = vunpack.c.h.b16 %v1015
        %v1053 = vunpack.c.l.b16 %v1016
        %v1054 = vunpack.c.h.b16 %v1016
        %v1055 = vunpack.c.l.b16 %v1017
        %v1056 = vunpack.c.h.b16 %v1017
        %v1057 = vunpack.c.l.b16 %v1018
        %v1058 = vunpack.c.h.b16 %v1018
        %v1059 = vunpack.c.l.b16 %v1019
        %v1060 = vunpack.c.h.b16 %v1019
        %v1061 = vunpack.c.l.b16 %v1020
        %v1062 = vunpack.c.h.b16 %v1020
        %v1063 = vunpack.c.l.b16 %v1021
        %v1064 = vunpack.c.h.b16 %v1021
        %v1065 = vunpack.c.l.b16 %v1022
        %v1066 = vunpack.c.h.b16 %v1022
        %v1067 = vunpack.c.l.b16 %v1023
        %v1068 = vunpack.c.h.b16 %v1023
        %v1069 = vunpack.c.l.b16 %v1024
        %v1070 = vunpack.c.h.b16 %v1024
        %v1071 = vunpack.c.l.b16 %v1025
        %v1072 = vunpack.c.h.b16 %v1025
        %v1073 = vunpack.c.l.b16 %v1026
        %v1074 = vunpack.c.h.b16 %v1026
        %v1075 = vpack.c.b16 %v1043, %v1043
        %v1076 = vpack.c.b16 %v1044, %v1044
        %v1077 = vpack.c.b16 %v1045, %v1045
        %v1078 = vpack.c.b16 %v1046, %v1046
        %v1079 = vpack.c.b16 %v1047, %v1047
        %v1080 = vpack.c.b16 %v1048, %v1048
        %v1081 = vpack.c.b16 %v1049, %v1049
        %v1082 = vpack.c.b16 %v1050, %v1050
        %v1083 = vpack.c.b16 %v1051, %v1051
        %v1084 = vpack.c.b16 %v1052, %v1052
        %v1085 = vpack.c.b16 %v1053, %v1053
        %v1086 = vpack.c.b16 %v1054, %v1054
        %v1087 = vpack.c.b16 %v1055, %v1055
        %v1088 = vpack.c.b16 %v1056, %v1056
        %v1089 = vpack.c.b16 %v1057, %v1057
        %v1090 = vpack.c.b16 %v1058, %v1058
        %v1091 = vpack.c.b16 %v1059, %v1059
        %v1092 = vpack.c.b16 %v1060, %v1060
        %v1093 = vpack.c.b16 %v1061, %v1061
        %v1094 = vpack.c.b16 %v1062, %v1062
        %v1095 = vpack.c.b16 %v1063, %v1063
        %v1096 = vpack.c.b16 %v1064, %v1064
        %v1097 = vpack.c.b16 %v1065, %v1065
        %v1098 = vpack.c.b16 %v1066, %v1066
        %v1099 = vpack.c.b16 %v1067, %v1067
        %v1100 = vpack.c.b16 %v1068, %v1068
        %v1101 = vpack.c.b16 %v1069, %v1069
        %v1102 = vpack.c.b16 %v1070, %v1070
        %v1103 = vpack.c.b16 %v1071, %v1071
        %v1104 = vpack.c.b16 %v1072, %v1072
        %v1105 = vpack.c.b16 %v1073, %v1073
        %v1106 = vpack.c.b16 %v1074, %v1074
        %1139 = vst [vmem:[%s319] sm:$0xf] %v1075
        %1140 = vst [vmem:[%s319 + $0x4] sm:$0xf] %v1076
        %1141 = vst [vmem:[%s319 + $0x8] sm:$0xf] %v1077
        %1142 = vst [vmem:[%s319 + $0xc] sm:$0xf] %v1078
        %1143 = vst [vmem:[%s319 + $0x10] sm:$0xf] %v1079
        %1144 = vst [vmem:[%s319 + $0x14] sm:$0xf] %v1080
        %1145 = vst [vmem:[%s319 + $0x18] sm:$0xf] %v1081
        %1146 = vst [vmem:[%s319 + $0x1c] sm:$0xf] %v1082
        %1147 = vst [vmem:[%s319 + $0x20] sm:$0xf] %v1083
        %1148 = vst [vmem:[%s319 + $0x24] sm:$0xf] %v1084
        %1149 = vst [vmem:[%s319 + $0x28] sm:$0xf] %v1085
        %1150 = vst [vmem:[%s319 + $0x2c] sm:$0xf] %v1086
        %1151 = vst [vmem:[%s319 + $0x30] sm:$0xf] %v1087
        %1152 = vst [vmem:[%s319 + $0x34] sm:$0xf] %v1088
        %1153 = vst [vmem:[%s319 + $0x38] sm:$0xf] %v1089
        %1154 = vst [vmem:[%s319 + $0x3c] sm:$0xf] %v1090
        %1155 = vst [vmem:[%s319 + $0x40] sm:$0xf] %v1091
        %1156 = vst [vmem:[%s319 + $0x44] sm:$0xf] %v1092
        %1157 = vst [vmem:[%s319 + $0x48] sm:$0xf] %v1093
        %1158 = vst [vmem:[%s319 + $0x4c] sm:$0xf] %v1094
        %1159 = vst [vmem:[%s319 + $0x50] sm:$0xf] %v1095
        %1160 = vst [vmem:[%s319 + $0x54] sm:$0xf] %v1096
        %1161 = vst [vmem:[%s319 + $0x58] sm:$0xf] %v1097
        %1162 = vst [vmem:[%s319 + $0x5c] sm:$0xf] %v1098
        %1163 = vst [vmem:[%s319 + $0x60] sm:$0xf] %v1099
        %1164 = vst [vmem:[%s319 + $0x64] sm:$0xf] %v1100
        %1165 = vst [vmem:[%s319 + $0x68] sm:$0xf] %v1101
        %1166 = vst [vmem:[%s319 + $0x6c] sm:$0xf] %v1102
        %1167 = vst [vmem:[%s319 + $0x70] sm:$0xf] %v1103
        %1168 = vst [vmem:[%s319 + $0x74] sm:$0xf] %v1104
        %1169 = vst [vmem:[%s319 + $0x78] sm:$0xf] %v1105
        %1170 = vst [vmem:[%s319 + $0x7c] sm:$0xf] %v1106
        %s1171 = sand.u32 %s153, 1
        %s1172 = scalar_lea.sflag [#allocation4], %s1171
        %s1173 = sand.u32 %s153, 1
        %s1174 = smul.addr %s1173, 128
        %s1175 = scalar_lea.vmem [#allocation8], %s1174
        // Predicated region
        $region53: #{tpu_custom_call.1} parent=39 // pred_check
          %p1176 = pneg %p163
        $region54: #{tpu_custom_call.1} parent=39 // pred_check_branch
          %1178 = sbr.rel (%p1176) target = $region56
        $region55: #{tpu_custom_call.1} parent=39 // pred_region
          %s1179 = smul.u32 32, %s25
          %s1181 = ssub.s32 2048, 2048
          %1182 = vsyncadd %s1172, %s1181
          %s1183 = smul.addr %s1179, 64
          %s1184 = scalar_lea.hbm %s5, %s1183
          %s1185 = sshll.u32 %s1175, 4
          %s1186 = int_to_ptr.vmem [resolvable:$true] %s1185
          %1191 = dma.vmem_to_hbm [thread:$0]  %s1186, 2048, %s1184, %s1172, 64, 64, 4
        $region56: #{tpu_custom_call.1} parent=39 // pred_fallthru
          _
      $region40: #{tpu_custom_call.1} parent=5 // pred_fallthru
        _
      %p1192 = scmp.le.s32.totalorder 2, %s20
      // Predicated region
      $region57: #{tpu_custom_call.1} parent=5 // pred_check
        %p1193 = pneg %p1192
      $region58: #{tpu_custom_call.1} parent=5 // pred_check_branch
        %1195 = sbr.rel (%p1193) target = $region60
      $region59: #{tpu_custom_call.1} parent=5 // pred_region
        %s1196 = ssub.s32 %s20, 2
        // Predicated region
        $region61: #{tpu_custom_call.1} parent=59 // pred_check
          %p1197 = pneg %p169
        $region62: #{tpu_custom_call.1} parent=59 // pred_check_branch
          %1199 = sbr.rel (%p1197) target = $region64
        $region63: #{tpu_custom_call.1} parent=59 // pred_region
          %s1200 = sand.u32 %s154, 1
          %s1201 = scalar_lea.sflag [#allocation4], %s1200
          %s1202 = sand.u32 %s154, 1
          %s1203 = smul.addr %s1202, 128
          %s1204 = scalar_lea.vmem [#allocation8], %s1203
          %1205 = dma.done %s1201, 2048
        $region64: #{tpu_custom_call.1} parent=59 // pred_fallthru
          _
      $region60: #{tpu_custom_call.1} parent=5 // pred_fallthru
        _
    $region6: #{tpu_custom_call.1} parent=1 // loop_footer
      %s24 = sadd.s32 1, %s20
    $region7: #{tpu_custom_call.1} parent=1 // loop_footer_branch
      %19 = sbr.rel target = $region3
    $region8: #{tpu_custom_call.1} parent=1 // loop_exit
      _
    %1206 = vsyncpa [#allocation3], 1
    %s1207 = scalar_lea.sflag [#allocation3], 1
    %1208 = vsyncpa %s1207, 1
    %1209 = vsyncpa [#allocation6], 1
    %s1210 = scalar_lea.sflag [#allocation6], 1
    %1211 = vsyncpa %s1210, 1
    %1212 = vsyncpa [#allocation4], 1
    %s1213 = scalar_lea.sflag [#allocation4], 1
    %1214 = vsyncpa %s1213, 1

</llo_original>
